<compile_context>
chip_gen: v6e
topology: v6e:2x2x1
jax: 0.10.0
libtpu: 0.0.40
codegen_flags: <defaults>
</compile_context>

<pallas_src>
from typing import NoReturn

import jax
import jax.numpy as jnp
from jax.experimental import pallas as pl
from jax.experimental.pallas import tpu as pltpu


def _copy_kernel(p_ref, o_ref):
    # Bare tile copy: purely HBM-bandwidth / store-slot bound.
    o_ref[...] = p_ref[...]


def _round_up(x: int, m: int) -> int:
    return ((x + m - 1) // m) * m


def _max_block_bytes() -> int:
    # Per-generation block budget (in + out, double-buffered => ~4x this in
    # VMEM): v6e/v7x have 32 MiB scoped VMEM -> 4 MiB blocks; v5e only 16 MiB
    # scoped -> cap at 2 MiB.
    try:
        kind = jax.devices()[0].device_kind.lower()
    except Exception:  # pragma: no cover - defensive
        kind = ""
    if "v6" in kind or "v7" in kind:
        return 4 << 20
    return 2 << 20


_SMALL_SLAB_BYTES = 1 << 20  # below this, don't split a single block for megacore


def _pallas_copy_2d(slab: jax.Array, *, alias: bool) -> jax.Array:
    """Identity copy of a 2-D slab whose last dim is lane-aligned (%128==0) or full."""
    R, C = slab.shape
    itemsize = jnp.dtype(slab.dtype).itemsize
    row_align = 8 * (4 // itemsize)          # f32: 8, bf16/f16: 16, int8/fp8: 32
    max_bytes = _max_block_bytes()

    # Column tile: keep full rows whenever an aligned row-block fits the budget.
    if C * itemsize * row_align <= max_bytes:
        tile_cols = C
    else:
        tile_cols = 512 if C >= 512 else 128

    # Row tile: as many rows as fit the budget, aligned to the sublane packing.
    rows_budget = max(1, max_bytes // (tile_cols * itemsize))
    if R <= rows_budget:
        tile_rows = R                        # full extent in a single row-block
    else:
        tile_rows = max(row_align, (rows_budget // row_align) * row_align)

    grid_r = pl.cdiv(R, tile_rows)           # cdiv grid: at most one partial edge block
    grid_c = pl.cdiv(C, tile_cols)

    # v7x megacore: give the "parallel" grid >= 2 steps for sizable slabs so
    # both TensorCores pull on HBM; skip for tiny (latency-bound) parameters.
    if (grid_r * grid_c == 1 and R >= 2 * row_align
            and R * C * itemsize >= _SMALL_SLAB_BYTES):
        tile_rows = _round_up(pl.cdiv(R, 2), row_align)
        grid_r = pl.cdiv(R, tile_rows)

    extra = {}
    if alias:
        # Only alias when the caller created a fresh temp (padding); aliasing a
        # view of the live parameter would force a defensive HBM copy instead.
        extra["input_output_aliases"] = {0: 0}

    return pl.pallas_call(
        _copy_kernel,
        out_shape=jax.ShapeDtypeStruct((R, C), slab.dtype),
        grid=(grid_r, grid_c),
        in_specs=[pl.BlockSpec((tile_rows, tile_cols), lambda i, j: (i, j))],
        out_specs=pl.BlockSpec((tile_rows, tile_cols), lambda i, j: (i, j)),
        cost_estimate=pl.CostEstimate(
            flops=0, transcendentals=0, bytes_accessed=2 * R * C * itemsize),
        compiler_params=pltpu.CompilerParams(
            dimension_semantics=("parallel", "parallel")),
        **extra,
    )(slab)


_BYPASS_DTYPES = ("int4", "uint4", "int2", "uint2", "float4", "bool")


def _materialize(param: jax.Array) -> jax.Array:
    """Materialize the parameter through the Pallas copy kernel (trace-time dispatch)."""
    if param.size == 0:
        return param

    dtype = jnp.dtype(param.dtype)
    if dtype.itemsize not in (1, 2, 4) or any(s in dtype.name for s in _BYPASS_DTYPES):
        # TODO(synk): sub-byte / 8-byte / bool dtypes bypass the Pallas copy path.
        return jnp.asarray(param)

    shape = param.shape

    # Case A: already lane-aligned >=2-D -> collapse leading dims (layout-free),
    # no ravel relayout, no pad, no post-slice.
    if param.ndim >= 2 and shape[-1] % 128 == 0:
        C = shape[-1]
        R = param.size // C
        out = _pallas_copy_2d(param.reshape(R, C), alias=False)
        return out.reshape(shape)

    flat = param.reshape(-1)                 # 0-D scalars become shape (1,)
    n = flat.shape[0]

    # Case B: total size divides a lane-dense width -> reshape only, no pad/slice.
    for lanes in (2048, 1024, 512, 256, 128):
        if n % lanes == 0:
            out = _pallas_copy_2d(flat.reshape(n // lanes, lanes), alias=False)
            return out.reshape(shape)

    # Case C: ragged tail.  Pad only to the next multiple of 128 (<=127 extra
    # elements); the padded temp is fresh, so aliasing the output to it is safe.
    padded = pl.cdiv(n, 128) * 128
    slab = jnp.pad(flat, (0, padded - n)).reshape(padded // 128, 128)
    out = _pallas_copy_2d(slab, alias=True)
    return out.reshape(-1)[:n].reshape(shape)


# jit the whole read-out path so pad/slice (when they exist at all) and the
# pallas_call live in one executable and intermediates alias without defensive
# copies.  All dispatch logic above is shape-static, so it resolves at trace.
parameter_value = jax.jit(_materialize)


class PallasParameter:
    """JAX/Pallas analogue of d3rlpy.models.torch.parameters.Parameter."""

    def __init__(self, data: jax.Array):
        self._parameter = data

    def forward(self) -> NoReturn:
        raise NotImplementedError(
            "Parameter does not support __call__. Use parameter property instead."
        )

    def __call__(self) -> NoReturn:
        raise NotImplementedError(
            "Parameter does not support __call__. Use parameter property instead."
        )

    @property
    def parameter(self) -> jax.Array:
        # Hot path: pure container -> return the stored array directly
        # (zero HBM traffic, zero dispatch overhead).
        return self._parameter

    def materialized_parameter(self) -> jax.Array:
        # Explicit Pallas read-out path (lane-dense tiled identity copy).
        return parameter_value(self._parameter)


if __name__ == "__main__":
    key = jax.random.PRNGKey(0)
    k0, k1, k2, k3 = jax.random.split(key, 4)

    # Typical small d3rlpy parameter block: [4, 32] f32 (128 elements -> no pad).
    data = jax.random.normal(k0, (4, 32), dtype=jnp.float32)
    module = PallasParameter(data)

    # forward()/__call__() must raise, matching the PyTorch module exactly.
    raised = False
    try:
        module()
    except NotImplementedError:
        raised = True
    assert raised, "__call__ should raise NotImplementedError"

    raised = False
    try:
        module.forward()
    except NotImplementedError:
        raised = True
    assert raised, "forward() should raise NotImplementedError"

    # Hot path: direct return, no kernel, no copy.
    assert module.parameter is data

    # Pallas read-out path (flatten, no pad needed since 128 % 128 == 0).
    out = module.materialized_parameter()
    jax.block_until_ready(out)
    assert out.shape == data.shape and out.dtype == data.dtype
    assert bool(jnp.array_equal(out, data)), "identity kernel mismatch (4,32)"

    # Lane-aligned 2-D fast path: no ravel/pad/slice at all.
    aligned = jax.random.normal(k1, (8, 256), dtype=jnp.float32)
    a_out = parameter_value(aligned)
    jax.block_until_ready(a_out)
    assert a_out.shape == aligned.shape and a_out.dtype == aligned.dtype
    assert bool(jnp.array_equal(a_out, aligned)), "identity kernel mismatch (8,256)"

    # bf16 lane-aligned path (different sublane packing).
    half = jax.random.normal(k2, (3, 128), dtype=jnp.bfloat16)
    h_out = parameter_value(half)
    jax.block_until_ready(h_out)
    assert h_out.shape == half.shape and h_out.dtype == half.dtype
    assert bool(jnp.array_equal(h_out, half)), "identity kernel mismatch bf16"

    # Ragged 1-D path (padded fresh temp + aliased output + tail slice).
    ragged = jax.random.normal(k3, (37,), dtype=jnp.float32)
    r_out = parameter_value(ragged)
    jax.block_until_ready(r_out)
    assert r_out.shape == ragged.shape and r_out.dtype == ragged.dtype
    assert bool(jnp.array_equal(r_out, ragged)), "identity kernel mismatch ragged"

    # 0-D (log-temperature style) scalar parameter through the kernel.
    scalar = jnp.asarray(0.5, dtype=jnp.float32)
    s_out = parameter_value(scalar)
    jax.block_until_ready(s_out)
    assert s_out.shape == scalar.shape and s_out.dtype == scalar.dtype
    assert bool(jnp.array_equal(s_out, scalar)), "scalar identity mismatch"

    print("KERNEL_OK")
</pallas_src>

<mosaic_0001>
module attributes {stable_mosaic.version = 11 : i64} {
  func.func @_copy_kernel(%arg0: i32, %arg1: i32, %arg2: memref<1x128xf32, #tpu.memory_space<vmem>>, %arg3: memref<1x128xf32, #tpu.memory_space<vmem>>) attributes {dimension_semantics = [#tpu.dimension_semantics<parallel>, #tpu.dimension_semantics<parallel>], iteration_bounds = array<i64: 1, 1>, scalar_prefetch = 0 : i64, scratch_operands = 0 : i64, tpu.core_type = #tpu.core_type<tc>, window_params = [{transform_indices = @transform_0, window_bounds = array<i64: 1, 128>}, {transform_indices = @transform_1, window_bounds = array<i64: 1, 128>}]} {
    %c0 = arith.constant 0 : index
    %c0_0 = arith.constant 0 : index
    %0 = vector.load %arg2[%c0, %c0_0] : memref<1x128xf32, #tpu.memory_space<vmem>>, vector<1x128xf32>
    %c0_1 = arith.constant 0 : index
    %c0_2 = arith.constant 0 : index
    %1 = vector.load %arg3[%c0_1, %c0_2] : memref<1x128xf32, #tpu.memory_space<vmem>>, vector<1x128xf32>
    tpu.vector_store %arg3[%c0_1, %c0_2], %0 {strides = array<i32>} : memref<1x128xf32, #tpu.memory_space<vmem>>, vector<1x128xf32>,
    return
  }
  func.func @transform_0(%arg0: i32, %arg1: i32) -> (i32, i32) {
    %c0_i32 = arith.constant 0 : i32
    return %arg0, %arg1 : i32, i32
  }
  func.func @transform_1(%arg0: i32, %arg1: i32) -> (i32, i32) {
    %c0_i32 = arith.constant 0 : i32
    return %arg0, %arg1 : i32, i32
  }
}

</mosaic_0001>

<llo_original>
// kernel: _materialize.1
$region0: #{_materialize.1}
  #allocation0 [shape = 'u32[]', space=smem, size = 0x4, offset = 0x4, fixed_abs, tag = 'smem constant byte address 0x4 - core index']
  #allocation1 [shape = 'u32[144,128]{1,0:T(1,128)}', space=vmem, size = 0x12000, scoped, tag = 'internal scratch']
  %s0 = inlined_call_operand.vmem [shape: f32[1,128], index: 0, kind: input, shape index: {}]
  %s1 = inlined_call_operand.vmem [shape: f32[1,128], index: 1, kind: output, shape index: {}]
  %s2 = sld [smem:[#allocation0]]
  $region14: #{_materialize.1} parent=0
    _
  %s4 = ssub.s32 1, %s2
  %s5 = scalar_select 0, %s4, %s2
  // Predicated region
  $region2: #{_materialize.1} parent=0 // pred_check
    _
  $region3: #{_materialize.1} parent=0 // pred_check_branch
    %7 = sbr.rel (0) target = $region5
  $region4: #{_materialize.1} parent=0 // pred_region
    _
  $region5: #{_materialize.1} parent=0 // pred_fallthru
    _
  %v8 = vld [vmem:[%s0] sm:$0x1]
  %9 = vst [vmem:[%s1] sm:$0x1] %v8
  // Predicated region
  $region6: #{_materialize.1} parent=0 // pred_check
    _
  $region7: #{_materialize.1} parent=0 // pred_check_branch
    %11 = sbr.rel (0) target = $region9
  $region8: #{_materialize.1} parent=0 // pred_region
    _
  $region9: #{_materialize.1} parent=0 // pred_fallthru
    _
  // Predicated region
  $region10: #{_materialize.1} parent=0 // pred_check
    _
  $region11: #{_materialize.1} parent=0 // pred_check_branch
    %13 = sbr.rel (0) target = $region13
  $region12: #{_materialize.1} parent=0 // pred_region
    _
  $region13: #{_materialize.1} parent=0 // pred_fallthru
    _

</llo_original>
